<compile_context>
chip_gen: v6e
topology: v6e:2x2x1
jax: 0.10.0
libtpu: 0.0.40
codegen_flags: <defaults>
</compile_context>

<pallas_src>
import jax
import jax.numpy as jnp
from jax.experimental import pallas as pl
from jax.experimental.pallas import tpu as pltpu

FEAT_MAP_SZ = 4
N_FEAT = 16 * FEAT_MAP_SZ * FEAT_MAP_SZ   # 256
HIDDEN1 = 256
HIDDEN2 = 128
OUT_SIZE = 128

TM_MAX = 2048            # row-tile cap; ~6.5 MiB VMEM at tm=2048 incl. double buffering
SPLIT_ROWS = 512         # batches >= this get >=2 balanced tiles (keeps both v7x TCs busy)
SMALL_BATCH_ROWS = 16    # below this, pallas launch + weight DMA dominate -> fused XLA path


def _round_up(x, m):
    return (x + m - 1) // m * m


# --------------------------------------------------------------------------- #
# Kernel
# --------------------------------------------------------------------------- #
def _mlp_kernel(x_ref, w1_ref, b1_ref, w2_ref, b2_ref, w3_ref, b3_ref, o_ref):
    # x arrives as f32 (HBM read at 4 B/elem, no wrapper convert pass); the
    # bf16 cast happens on the VPU and is hidden under DMA / MXU work.
    x = x_ref[...].astype(jnp.bfloat16)                               # [TM, 256] bf16
    h1 = jnp.dot(x, w1_ref[...], preferred_element_type=jnp.float32) + b1_ref[...]
    h1 = jnp.maximum(h1, 0.0).astype(jnp.bfloat16)                    # ReLU, back to bf16
    h2 = jnp.dot(h1, w2_ref[...], preferred_element_type=jnp.float32) + b2_ref[...]
    h2 = jnp.maximum(h2, 0.0).astype(jnp.bfloat16)                    # ReLU, back to bf16
    out = jnp.dot(h2, w3_ref[...], preferred_element_type=jnp.float32) + b3_ref[...]
    o_ref[...] = out.astype(o_ref.dtype)                              # f32 store, lane-dense


def _choose_tiling(rows):
    """Pick (tm, grid) so tiles are large, balanced, and padding-free."""
    n_tiles = pl.cdiv(rows, TM_MAX)
    if rows >= SPLIT_ROWS and n_tiles < 2:
        n_tiles = 2                      # give v7x's 2 TensorCores one real tile each
    tm = min(_round_up(pl.cdiv(rows, n_tiles), 8), TM_MAX)
    return tm, pl.cdiv(rows, tm)


def _pallas_forward(x, params):
    """x: [B, 256] float32. Returns [B, OUT_SIZE] float32."""
    w1, b1, w2, b2, w3, b3 = params      # weights already bf16, biases f32
    B = x.shape[0]

    # Only align tiny/odd batches to the 8-row sublane granule (<=7 pad rows);
    # everything else relies on the ragged last block (rows are independent,
    # OOB reads feed garbage rows whose stores are dropped).
    rows = _round_up(B, 8)
    if rows != B:
        x = jnp.pad(x, ((0, rows - B), (0, 0)))

    tm, grid_rows = _choose_tiling(rows)

    row = lambda i: (i, 0)     # x / out: new row tile each grid step
    const = lambda i: (0, 0)   # weights / biases: VMEM-resident across all steps

    flops = 2 * B * (N_FEAT * HIDDEN1 + HIDDEN1 * HIDDEN2 + HIDDEN2 * OUT_SIZE)
    bytes_accessed = (
        rows * N_FEAT * 4                              # x read (f32)
        + (w1.size + w2.size + w3.size) * 2            # bf16 weights, read once
        + (b1.size + b2.size + b3.size) * 4            # f32 biases
        + B * OUT_SIZE * 4                             # f32 output
    )

    out = pl.pallas_call(
        _mlp_kernel,
        out_shape=jax.ShapeDtypeStruct((B, OUT_SIZE), jnp.float32),
        grid=(grid_rows,),
        in_specs=[
            pl.BlockSpec((tm, N_FEAT), row),
            pl.BlockSpec((N_FEAT, HIDDEN1), const),
            pl.BlockSpec((1, HIDDEN1), const),
            pl.BlockSpec((HIDDEN1, HIDDEN2), const),
            pl.BlockSpec((1, HIDDEN2), const),
            pl.BlockSpec((HIDDEN2, OUT_SIZE), const),
            pl.BlockSpec((1, OUT_SIZE), const),
        ],
        out_specs=pl.BlockSpec((tm, OUT_SIZE), row),
        compiler_params=pltpu.CompilerParams(
            dimension_semantics=("parallel",),        # shard row tiles across v7x's 2 TCs
            vmem_limit_bytes=32 * 1024 * 1024,        # explicit; fits v7x scoped VMEM
        ),
        cost_estimate=pl.CostEstimate(
            flops=flops, transcendentals=0, bytes_accessed=bytes_accessed),
    )(x, w1, b1, w2, b2, w3, b3)

    return out


def _xla_small_batch(x, params):
    """Latency-bound tiny-batch path: three fused GEMMs, same mixed precision
    as the kernel (bf16 operands, f32 accumulation + biases)."""
    w1, b1, w2, b2, w3, b3 = params
    h1 = jnp.dot(x.astype(jnp.bfloat16), w1, preferred_element_type=jnp.float32) + b1
    h1 = jnp.maximum(h1, 0.0)
    h2 = jnp.dot(h1.astype(jnp.bfloat16), w2, preferred_element_type=jnp.float32) + b2
    h2 = jnp.maximum(h2, 0.0)
    return jnp.dot(h2.astype(jnp.bfloat16), w3, preferred_element_type=jnp.float32) + b3


def km_generator_forward(features_map, params, *, force_pallas=False):
    """features_map: [B, 16, 4, 4] (NCHW). params from prepare_params().
    Returns [B, OUT_SIZE] float32."""
    x = features_map.reshape(-1, N_FEAT).astype(jnp.float32)  # same flattening as torch .view
    B = x.shape[0]
    if B < SMALL_BATCH_ROWS and not force_pallas:
        return _xla_small_batch(x, params)
    return _pallas_forward(x, params)


# --------------------------------------------------------------------------- #
# Parameters
# --------------------------------------------------------------------------- #
def init_params(key):
    """Deterministic synthetic f32 params. nn.Linear stores W as [out, in]; we
    build [in, out] directly (equivalent to passing W.T). Biases kept 2D
    ([1, out]) so they live lane-major and broadcast over rows."""
    k = jax.random.split(key, 6)

    def lin(kw, kb, fan_in, fan_out):
        bound = 1.0 / jnp.sqrt(fan_in)
        w = jax.random.uniform(kw, (fan_in, fan_out), jnp.float32, -bound, bound)
        b = jax.random.uniform(kb, (1, fan_out), jnp.float32, -bound, bound)
        return w, b

    w1, b1 = lin(k[0], k[1], N_FEAT, HIDDEN1)
    w2, b2 = lin(k[2], k[3], HIDDEN1, HIDDEN2)
    w3, b3 = lin(k[4], k[5], HIDDEN2, OUT_SIZE)
    return (w1, b1, w2, b2, w3, b3)


def prepare_params(params_f32):
    """One-time prep: bf16 weights (MXU fast path, half the weight HBM traffic),
    f32 biases. Do NOT redo this per forward call."""
    w1, b1, w2, b2, w3, b3 = params_f32
    return (w1.astype(jnp.bfloat16), b1.astype(jnp.float32),
            w2.astype(jnp.bfloat16), b2.astype(jnp.float32),
            w3.astype(jnp.bfloat16), b3.astype(jnp.float32))


# --------------------------------------------------------------------------- #
# References
# --------------------------------------------------------------------------- #
def _reference_f32(features_map, params_f32):
    w1, b1, w2, b2, w3, b3 = params_f32
    x = features_map.reshape(-1, N_FEAT)
    h1 = jnp.maximum(x @ w1 + b1, 0.0)
    h2 = jnp.maximum(h1 @ w2 + b2, 0.0)
    return h2 @ w3 + b3


def _reference_bf16(features_map, params_f32):
    """Matches the kernel's mixed precision (bf16 operands, f32 accum + bias)."""
    w1, b1, w2, b2, w3, b3 = params_f32
    x = features_map.reshape(-1, N_FEAT).astype(jnp.bfloat16)
    h1 = jnp.dot(x, w1.astype(jnp.bfloat16), preferred_element_type=jnp.float32) + b1
    h1 = jnp.maximum(h1, 0.0).astype(jnp.bfloat16)
    h2 = jnp.dot(h1, w2.astype(jnp.bfloat16), preferred_element_type=jnp.float32) + b2
    h2 = jnp.maximum(h2, 0.0).astype(jnp.bfloat16)
    return jnp.dot(h2, w3.astype(jnp.bfloat16), preferred_element_type=jnp.float32) + b3


if __name__ == "__main__":
    key = jax.random.PRNGKey(0)
    k_x, k_p, k_x2 = jax.random.split(key, 3)

    params_f32 = init_params(k_p)
    params = prepare_params(params_f32)   # one-time bf16 weight cast

    # Tiny batch (the module's typical single-agent use).
    B = 2
    features_map = jax.random.normal(k_x, (B, 16, FEAT_MAP_SZ, FEAT_MAP_SZ), jnp.float32)

    # Exercise the Pallas kernel itself at the tiny shape.
    out = jax.block_until_ready(km_generator_forward(features_map, params, force_pallas=True))
    assert out.shape == (B, OUT_SIZE)
    assert jnp.allclose(out, _reference_bf16(features_map, params_f32), atol=1e-2, rtol=1e-2)
    assert jnp.allclose(out, _reference_f32(features_map, params_f32), atol=5e-2, rtol=5e-2)

    # Default dispatch for tiny batches takes the fused-XLA latency path.
    out_small = jax.block_until_ready(km_generator_forward(features_map, params))
    assert out_small.shape == (B, OUT_SIZE)
    assert jnp.allclose(out_small, out, atol=1e-2, rtol=1e-2)

    # Larger batch: two balanced row tiles (304 rows each), ragged last block,
    # no jnp.pad copy, weights stay VMEM-resident across grid steps.
    B2 = 600
    features_map2 = jax.random.normal(k_x2, (B2, 16, FEAT_MAP_SZ, FEAT_MAP_SZ), jnp.float32)
    out2 = jax.block_until_ready(km_generator_forward(features_map2, params))
    assert out2.shape == (B2, OUT_SIZE)
    assert jnp.allclose(out2, _reference_bf16(features_map2, params_f32), atol=1e-2, rtol=1e-2)

    print("KERNEL_OK")
</pallas_src>

<mosaic_0001>
module attributes {stable_mosaic.version = 11 : i64} {
  func.func @_mlp_kernel(%arg0: i32, %arg1: memref<8x256xf32, #tpu.memory_space<vmem>>, %arg2: memref<256x256xbf16, #tpu.memory_space<vmem>>, %arg3: memref<1x256xf32, #tpu.memory_space<vmem>>, %arg4: memref<256x128xbf16, #tpu.memory_space<vmem>>, %arg5: memref<1x128xf32, #tpu.memory_space<vmem>>, %arg6: memref<128x128xbf16, #tpu.memory_space<vmem>>, %arg7: memref<1x128xf32, #tpu.memory_space<vmem>>, %arg8: memref<8x128xf32, #tpu.memory_space<vmem>>) attributes {dimension_semantics = [#tpu.dimension_semantics<parallel>], iteration_bounds = array<i64: 1>, scalar_prefetch = 0 : i64, scratch_operands = 0 : i64, tpu.core_type = #tpu.core_type<tc>, window_params = [{transform_indices = @transform_0, window_bounds = array<i64: 8, 256>}, {pipeline_mode = #tpu.pipeline_mode<synchronous>, transform_indices = @transform_1, window_bounds = array<i64: 256, 256>}, {pipeline_mode = #tpu.pipeline_mode<synchronous>, transform_indices = @transform_2, window_bounds = array<i64: 1, 256>}, {pipeline_mode = #tpu.pipeline_mode<synchronous>, transform_indices = @transform_3, window_bounds = array<i64: 256, 128>}, {pipeline_mode = #tpu.pipeline_mode<synchronous>, transform_indices = @transform_4, window_bounds = array<i64: 1, 128>}, {pipeline_mode = #tpu.pipeline_mode<synchronous>, transform_indices = @transform_5, window_bounds = array<i64: 128, 128>}, {pipeline_mode = #tpu.pipeline_mode<synchronous>, transform_indices = @transform_6, window_bounds = array<i64: 1, 128>}, {transform_indices = @transform_7, window_bounds = array<i64: 8, 128>}]} {
    %c0 = arith.constant 0 : index
    %c0_0 = arith.constant 0 : index
    %0 = vector.load %arg1[%c0, %c0_0] : memref<8x256xf32, #tpu.memory_space<vmem>>, vector<8x256xf32>
    %1 = arith.truncf %0 : vector<8x256xf32> to vector<8x256xbf16>
    %c0_1 = arith.constant 0 : index
    %c0_2 = arith.constant 0 : index
    %2 = vector.load %arg2[%c0_1, %c0_2] : memref<256x256xbf16, #tpu.memory_space<vmem>>, vector<256x256xbf16>
    %cst = arith.constant dense<0.000000e+00> : vector<8x256xf32>
    %3 = tpu.matmul %1, %2, %cst {dimension_numbers = #tpu.dot_dimension_numbers<[1], [0], [0], [1], [0, 0, 1, 1], [], []>} : vector<8x256xbf16>, vector<256x256xbf16>, vector<8x256xf32> -> vector<8x256xf32>
    %c0_3 = arith.constant 0 : index
    %c0_4 = arith.constant 0 : index
    %4 = vector.load %arg3[%c0_3, %c0_4] : memref<1x256xf32, #tpu.memory_space<vmem>>, vector<1x256xf32>
    %5 = vector.broadcast %4 : vector<1x256xf32> to vector<8x256xf32>
    %6 = arith.addf %3, %5 : vector<8x256xf32>
    %cst_5 = arith.constant 0.000000e+00 : f32
    %7 = vector.broadcast %cst_5 : f32 to vector<8x256xf32>
    %8 = arith.maximumf %6, %7 : vector<8x256xf32>
    %9 = arith.truncf %8 : vector<8x256xf32> to vector<8x256xbf16>
    %c0_6 = arith.constant 0 : index
    %c0_7 = arith.constant 0 : index
    %10 = vector.load %arg4[%c0_6, %c0_7] : memref<256x128xbf16, #tpu.memory_space<vmem>>, vector<256x128xbf16>
    %cst_8 = arith.constant dense<0.000000e+00> : vector<8x128xf32>
    %11 = tpu.matmul %9, %10, %cst_8 {dimension_numbers = #tpu.dot_dimension_numbers<[1], [0], [0], [1], [0, 0, 1, 1], [], []>} : vector<8x256xbf16>, vector<256x128xbf16>, vector<8x128xf32> -> vector<8x128xf32>
    %c0_9 = arith.constant 0 : index
    %c0_10 = arith.constant 0 : index
    %12 = vector.load %arg5[%c0_9, %c0_10] : memref<1x128xf32, #tpu.memory_space<vmem>>, vector<1x128xf32>
    %13 = vector.broadcast %12 : vector<1x128xf32> to vector<8x128xf32>
    %14 = arith.addf %11, %13 : vector<8x128xf32>
    %cst_11 = arith.constant 0.000000e+00 : f32
    %15 = vector.broadcast %cst_11 : f32 to vector<8x128xf32>
    %16 = arith.maximumf %14, %15 : vector<8x128xf32>
    %17 = arith.truncf %16 : vector<8x128xf32> to vector<8x128xbf16>
    %c0_12 = arith.constant 0 : index
    %c0_13 = arith.constant 0 : index
    %18 = vector.load %arg6[%c0_12, %c0_13] : memref<128x128xbf16, #tpu.memory_space<vmem>>, vector<128x128xbf16>
    %cst_14 = arith.constant dense<0.000000e+00> : vector<8x128xf32>
    %19 = tpu.matmul %17, %18, %cst_14 {dimension_numbers = #tpu.dot_dimension_numbers<[1], [0], [0], [1], [0, 0, 1, 1], [], []>} : vector<8x128xbf16>, vector<128x128xbf16>, vector<8x128xf32> -> vector<8x128xf32>
    %c0_15 = arith.constant 0 : index
    %c0_16 = arith.constant 0 : index
    %20 = vector.load %arg7[%c0_15, %c0_16] : memref<1x128xf32, #tpu.memory_space<vmem>>, vector<1x128xf32>
    %21 = vector.broadcast %20 : vector<1x128xf32> to vector<8x128xf32>
    %22 = arith.addf %19, %21 : vector<8x128xf32>
    %c0_17 = arith.constant 0 : index
    %c0_18 = arith.constant 0 : index
    %23 = vector.load %arg8[%c0_17, %c0_18] : memref<8x128xf32, #tpu.memory_space<vmem>>, vector<8x128xf32>
    tpu.vector_store %arg8[%c0_17, %c0_18], %22 {strides = array<i32>} : memref<8x128xf32, #tpu.memory_space<vmem>>, vector<8x128xf32>,
    return
  }
  func.func @transform_0(%arg0: i32) -> (i32, i32) {
    %c0_i32 = arith.constant 0 : i32
    %c0_i32_0 = arith.constant 0 : i32
    return %arg0, %c0_i32 : i32, i32
  }
  func.func @transform_1(%arg0: i32) -> (i32, i32) {
    %c0_i32 = arith.constant 0 : i32
    %c0_i32_0 = arith.constant 0 : i32
    %c0_i32_1 = arith.constant 0 : i32
    return %c0_i32, %c0_i32_0 : i32, i32
  }
  func.func @transform_2(%arg0: i32) -> (i32, i32) {
    %c0_i32 = arith.constant 0 : i32
    %c0_i32_0 = arith.constant 0 : i32
    %c0_i32_1 = arith.constant 0 : i32
    return %c0_i32, %c0_i32_0 : i32, i32
  }
  func.func @transform_3(%arg0: i32) -> (i32, i32) {
    %c0_i32 = arith.constant 0 : i32
    %c0_i32_0 = arith.constant 0 : i32
    %c0_i32_1 = arith.constant 0 : i32
    return %c0_i32, %c0_i32_0 : i32, i32
  }
  func.func @transform_4(%arg0: i32) -> (i32, i32) {
    %c0_i32 = arith.constant 0 : i32
    %c0_i32_0 = arith.constant 0 : i32
    %c0_i32_1 = arith.constant 0 : i32
    return %c0_i32, %c0_i32_0 : i32, i32
  }
  func.func @transform_5(%arg0: i32) -> (i32, i32) {
    %c0_i32 = arith.constant 0 : i32
    %c0_i32_0 = arith.constant 0 : i32
    %c0_i32_1 = arith.constant 0 : i32
    return %c0_i32, %c0_i32_0 : i32, i32
  }
  func.func @transform_6(%arg0: i32) -> (i32, i32) {
    %c0_i32 = arith.constant 0 : i32
    %c0_i32_0 = arith.constant 0 : i32
    %c0_i32_1 = arith.constant 0 : i32
    return %c0_i32, %c0_i32_0 : i32, i32
  }
  func.func @transform_7(%arg0: i32) -> (i32, i32) {
    %c0_i32 = arith.constant 0 : i32
    %c0_i32_0 = arith.constant 0 : i32
    return %arg0, %c0_i32 : i32, i32
  }
}

</mosaic_0001>

<llo_original>
// kernel: tpu_custom_call.1
$region0: #{tpu_custom_call.1}
  #allocation0 [shape = 'u32[]', space=smem, size = 0x4, offset = 0x4, fixed_abs, tag = 'smem constant byte address 0x4 - core index']
  #allocation1 [shape = 'u32[144,128]{1,0:T(1,128)}', space=vmem, size = 0x12000, scoped, tag = 'internal scratch']
  %s0 = inlined_call_operand.hbm [shape: f32[8,256], index: 0, kind: input, shape index: {}]
  %s1 = inlined_call_operand.hbm [shape: bf16[256,256], index: 1, kind: input, shape index: {}]
  %s2 = inlined_call_operand.vmem [shape: f32[1,256], index: 2, kind: input, shape index: {}]
  %s3 = inlined_call_operand.hbm [shape: bf16[256,128], index: 3, kind: input, shape index: {}]
  %s4 = inlined_call_operand.vmem [shape: f32[1,128], index: 4, kind: input, shape index: {}]
  %s5 = inlined_call_operand.hbm [shape: bf16[128,128], index: 5, kind: input, shape index: {}]
  %s6 = inlined_call_operand.vmem [shape: f32[1,128], index: 6, kind: input, shape index: {}]
  %s7 = inlined_call_operand.hbm [shape: f32[2,128], index: 7, kind: output, shape index: {}]
  %s8 = sld [smem:[#allocation0]]
  $region54: #{tpu_custom_call.1} parent=0
    _
  %s10 = ssub.s32 1, %s8
  %s11 = scalar_select 0, %s10, %s8
  $region1: #{tpu_custom_call.1} parent=0
    #allocation2 [shape = 'u8[8192]{0}', space=vmem, size = 0x2000, scoped, tag = 'input window, operand 0, single buffered']
    #allocation3 [shape = 's32[1]{0}', space=sflag, size = 0x4, scoped, tag = 'scoped memory for tpu_custom_call.1']
    #allocation4 [shape = 's32[1]{0}', space=sflag, size = 0x4, scoped, tag = 'scoped memory for tpu_custom_call.1']
    #allocation5 [shape = 'u8[131072]{0}', space=vmem, size = 0x20000, scoped, tag = 'input window, operand 1, single buffered']
    #allocation6 [shape = 's32[1]{0}', space=sflag, size = 0x4, scoped, tag = 'scoped memory for tpu_custom_call.1']
    #allocation7 [shape = 'u8[65536]{0}', space=vmem, size = 0x10000, scoped, tag = 'input window, operand 3, single buffered']
    #allocation8 [shape = 'u8[32768]{0}', space=vmem, size = 0x8000, scoped, tag = 'input window, operand 5, single buffered']
    #allocation9 [shape = 's32[1]{0}', space=sflag, size = 0x4, scoped, tag = 'scoped memory for tpu_custom_call.1']
    #allocation10 [shape = 'u8[4096]{0}', space=vmem, size = 0x1000, scoped, tag = 'output window, operand 0, single buffered']
    %12 = vsyncpa [#allocation3], 0
    %13 = vsyncpa [#allocation6], 0
    %14 = vsyncpa [#allocation9], 0
    %15 = vsyncpa [#allocation4], 0
    // Predicated region
    $region2: #{tpu_custom_call.1} parent=1 // pred_check
      _
    $region3: #{tpu_custom_call.1} parent=1 // pred_check_branch
      %17 = sbr.rel (0) target = $region5
    $region4: #{tpu_custom_call.1} parent=1 // pred_region
      %s19 = ssub.s32 256, 256
      %20 = vsyncadd [#allocation3], %s19
      %s22 = sshll.u32 [#allocation2], 4
      %s23 = int_to_ptr.vmem [resolvable:$true] %s22
      %25 = dma.hbm_to_vmem [thread:$0]  %s0, 256, %s23, [#allocation3]
    $region5: #{tpu_custom_call.1} parent=1 // pred_fallthru
      _
    // Predicated region
    $region6: #{tpu_custom_call.1} parent=1 // pred_check
      _
    $region7: #{tpu_custom_call.1} parent=1 // pred_check_branch
      %27 = sbr.rel (0) target = $region9
    $region8: #{tpu_custom_call.1} parent=1 // pred_region
      %s29 = ssub.s32 4096, 4096
      %30 = vsyncadd [#allocation6], %s29
      %s31 = sshll.u32 [#allocation5], 4
      %s32 = int_to_ptr.vmem [resolvable:$true] %s31
      %37 = dma.hbm_to_vmem [thread:$0]  %s1, 4096, %s32, [#allocation6], 128, 128, 8
    $region9: #{tpu_custom_call.1} parent=1 // pred_fallthru
      _
    // Predicated region
    $region10: #{tpu_custom_call.1} parent=1 // pred_check
      _
    $region11: #{tpu_custom_call.1} parent=1 // pred_check_branch
      %39 = sbr.rel (0) target = $region13
    $region12: #{tpu_custom_call.1} parent=1 // pred_region
      _
    $region13: #{tpu_custom_call.1} parent=1 // pred_fallthru
      _
    // Predicated region
    $region14: #{tpu_custom_call.1} parent=1 // pred_check
      _
    $region15: #{tpu_custom_call.1} parent=1 // pred_check_branch
      %41 = sbr.rel (0) target = $region17
    $region16: #{tpu_custom_call.1} parent=1 // pred_region
      %s43 = ssub.s32 2048, 2048
      %44 = vsyncadd [#allocation6], %s43
      %s45 = sshll.u32 [#allocation7], 4
      %s46 = int_to_ptr.vmem [resolvable:$true] %s45
      %51 = dma.hbm_to_vmem [thread:$0]  %s3, 2048, %s46, [#allocation6], 64, 64, 4
    $region17: #{tpu_custom_call.1} parent=1 // pred_fallthru
      _
    // Predicated region
    $region18: #{tpu_custom_call.1} parent=1 // pred_check
      _
    $region19: #{tpu_custom_call.1} parent=1 // pred_check_branch
      %53 = sbr.rel (0) target = $region21
    $region20: #{tpu_custom_call.1} parent=1 // pred_region
      _
    $region21: #{tpu_custom_call.1} parent=1 // pred_fallthru
      _
    // Predicated region
    $region22: #{tpu_custom_call.1} parent=1 // pred_check
      _
    $region23: #{tpu_custom_call.1} parent=1 // pred_check_branch
      %55 = sbr.rel (0) target = $region25
    $region24: #{tpu_custom_call.1} parent=1 // pred_region
      %s57 = ssub.s32 1024, 1024
      %58 = vsyncadd [#allocation9], %s57
      %s59 = sshll.u32 [#allocation8], 4
      %s60 = int_to_ptr.vmem [resolvable:$true] %s59
      %65 = dma.hbm_to_vmem [thread:$0]  %s5, 1024, %s60, [#allocation9], 64, 64, 4
    $region25: #{tpu_custom_call.1} parent=1 // pred_fallthru
      _
    // Predicated region
    $region26: #{tpu_custom_call.1} parent=1 // pred_check
      _
    $region27: #{tpu_custom_call.1} parent=1 // pred_check_branch
      %67 = sbr.rel (0) target = $region29
    $region28: #{tpu_custom_call.1} parent=1 // pred_region
      _
    $region29: #{tpu_custom_call.1} parent=1 // pred_fallthru
      _
    // Predicated region
    $region30: #{tpu_custom_call.1} parent=1 // pred_check
      _
    $region31: #{tpu_custom_call.1} parent=1 // pred_check_branch
      %69 = sbr.rel (0) target = $region33
    $region32: #{tpu_custom_call.1} parent=1 // pred_region
      %70 = dma.done [#allocation3], 256
    $region33: #{tpu_custom_call.1} parent=1 // pred_fallthru
      _
    // Predicated region
    $region34: #{tpu_custom_call.1} parent=1 // pred_check
      _
    $region35: #{tpu_custom_call.1} parent=1 // pred_check_branch
      %72 = sbr.rel (0) target = $region37
    $region36: #{tpu_custom_call.1} parent=1 // pred_region
      %73 = dma.done [#allocation6], 4096
    $region37: #{tpu_custom_call.1} parent=1 // pred_fallthru
      _
    // Predicated region
    $region38: #{tpu_custom_call.1} parent=1 // pred_check
      _
    $region39: #{tpu_custom_call.1} parent=1 // pred_check_branch
      %75 = sbr.rel (0) target = $region41
    $region40: #{tpu_custom_call.1} parent=1 // pred_region
      %76 = dma.done [#allocation6], 2048
    $region41: #{tpu_custom_call.1} parent=1 // pred_fallthru
      _
    // Predicated region
    $region42: #{tpu_custom_call.1} parent=1 // pred_check
      _
    $region43: #{tpu_custom_call.1} parent=1 // pred_check_branch
      %78 = sbr.rel (0) target = $region45
    $region44: #{tpu_custom_call.1} parent=1 // pred_region
      %79 = dma.done [#allocation9], 1024
    $region45: #{tpu_custom_call.1} parent=1 // pred_fallthru
      _
    %v81 = vld [vmem:[#allocation2] sm:$0xff]
    %v82 = vld [vmem:[#allocation2 + $0x8] sm:$0xff]
    %v83 = vpack.c.bf16 %v81, %v81
    %v84 = vpack.c.bf16 %v82, %v82
    %v85 = vld [vmem:[#allocation5] sm:$0xff]
    %v86 = vld [vmem:[#allocation5 + $0x8] sm:$0xff]
    %v87 = vld [vmem:[#allocation5 + $0x10] sm:$0xff]
    %v88 = vld [vmem:[#allocation5 + $0x18] sm:$0xff]
    %v89 = vld [vmem:[#allocation5 + $0x20] sm:$0xff]
    %v90 = vld [vmem:[#allocation5 + $0x28] sm:$0xff]
    %v91 = vld [vmem:[#allocation5 + $0x30] sm:$0xff]
    %v92 = vld [vmem:[#allocation5 + $0x38] sm:$0xff]
    %v93 = vld [vmem:[#allocation5 + $0x40] sm:$0xff]
    %v94 = vld [vmem:[#allocation5 + $0x48] sm:$0xff]
    %v95 = vld [vmem:[#allocation5 + $0x50] sm:$0xff]
    %v96 = vld [vmem:[#allocation5 + $0x58] sm:$0xff]
    %v97 = vld [vmem:[#allocation5 + $0x60] sm:$0xff]
    %v98 = vld [vmem:[#allocation5 + $0x68] sm:$0xff]
    %v99 = vld [vmem:[#allocation5 + $0x70] sm:$0xff]
    %v100 = vld [vmem:[#allocation5 + $0x78] sm:$0xff]
    %v101 = vld [vmem:[#allocation5 + $0x80] sm:$0xff]
    %v102 = vld [vmem:[#allocation5 + $0x88] sm:$0xff]
    %v103 = vld [vmem:[#allocation5 + $0x90] sm:$0xff]
    %v104 = vld [vmem:[#allocation5 + $0x98] sm:$0xff]
    %v105 = vld [vmem:[#allocation5 + $0xa0] sm:$0xff]
    %v106 = vld [vmem:[#allocation5 + $0xa8] sm:$0xff]
    %v107 = vld [vmem:[#allocation5 + $0xb0] sm:$0xff]
    %v108 = vld [vmem:[#allocation5 + $0xb8] sm:$0xff]
    %v109 = vld [vmem:[#allocation5 + $0xc0] sm:$0xff]
    %v110 = vld [vmem:[#allocation5 + $0xc8] sm:$0xff]
    %v111 = vld [vmem:[#allocation5 + $0xd0] sm:$0xff]
    %v112 = vld [vmem:[#allocation5 + $0xd8] sm:$0xff]
    %v113 = vld [vmem:[#allocation5 + $0xe0] sm:$0xff]
    %v114 = vld [vmem:[#allocation5 + $0xe8] sm:$0xff]
    %v115 = vld [vmem:[#allocation5 + $0xf0] sm:$0xff]
    %v116 = vld [vmem:[#allocation5 + $0xf8] sm:$0xff]
    %v117 = vld [vmem:[%s2] sm:$0x3]
    %v119 = vlaneseq
    %v120 = vshrl.u32 %v119, 7
    %v121 = vsub.s32 0, %v120
    %v122 = vrot.slane %v117, %v121
    %v123 = vlaneseq
    %v124 = vshrl.u32 %v123, 7
    %v125 = vsub.s32 1, %v124
    %v126 = vrot.slane %v117, %v125
    %v161 = vunpack.c.l.b16 %v85
    %v162 = vunpack.c.h.b16 %v85
    %v163 = vunpack.c.l.b16 %v86
    %v164 = vunpack.c.h.b16 %v86
    %v165 = vunpack.c.l.b16 %v87
    %v166 = vunpack.c.h.b16 %v87
    %v167 = vunpack.c.l.b16 %v88
    %v168 = vunpack.c.h.b16 %v88
    %v169 = vunpack.c.l.b16 %v89
    %v170 = vunpack.c.h.b16 %v89
    %v171 = vunpack.c.l.b16 %v90
    %v172 = vunpack.c.h.b16 %v90
    %v173 = vunpack.c.l.b16 %v91
    %v174 = vunpack.c.h.b16 %v91
    %v175 = vunpack.c.l.b16 %v92
    %v176 = vunpack.c.h.b16 %v92
    %v177 = vunpack.c.l.b16 %v93
    %v178 = vunpack.c.h.b16 %v93
    %v179 = vunpack.c.l.b16 %v94
    %v180 = vunpack.c.h.b16 %v94
    %v181 = vunpack.c.l.b16 %v95
    %v182 = vunpack.c.h.b16 %v95
    %v183 = vunpack.c.l.b16 %v96
    %v184 = vunpack.c.h.b16 %v96
    %v185 = vunpack.c.l.b16 %v97
    %v186 = vunpack.c.h.b16 %v97
    %v187 = vunpack.c.l.b16 %v98
    %v188 = vunpack.c.h.b16 %v98
    %v189 = vunpack.c.l.b16 %v99
    %v190 = vunpack.c.h.b16 %v99
    %v191 = vunpack.c.l.b16 %v100
    %v192 = vunpack.c.h.b16 %v100
    %v193 = vunpack.c.l.b16 %v101
    %v194 = vunpack.c.h.b16 %v101
    %v195 = vunpack.c.l.b16 %v102
    %v196 = vunpack.c.h.b16 %v102
    %v197 = vunpack.c.l.b16 %v103
    %v198 = vunpack.c.h.b16 %v103
    %v199 = vunpack.c.l.b16 %v104
    %v200 = vunpack.c.h.b16 %v104
    %v201 = vunpack.c.l.b16 %v105
    %v202 = vunpack.c.h.b16 %v105
    %v203 = vunpack.c.l.b16 %v106
    %v204 = vunpack.c.h.b16 %v106
    %v205 = vunpack.c.l.b16 %v107
    %v206 = vunpack.c.h.b16 %v107
    %v207 = vunpack.c.l.b16 %v108
    %v208 = vunpack.c.h.b16 %v108
    %v209 = vunpack.c.l.b16 %v109
    %v210 = vunpack.c.h.b16 %v109
    %v211 = vunpack.c.l.b16 %v110
    %v212 = vunpack.c.h.b16 %v110
    %v213 = vunpack.c.l.b16 %v111
    %v214 = vunpack.c.h.b16 %v111
    %v215 = vunpack.c.l.b16 %v112
    %v216 = vunpack.c.h.b16 %v112
    %v217 = vunpack.c.l.b16 %v113
    %v218 = vunpack.c.h.b16 %v113
    %v219 = vunpack.c.l.b16 %v114
    %v220 = vunpack.c.h.b16 %v114
    %v221 = vunpack.c.l.b16 %v115
    %v222 = vunpack.c.h.b16 %v115
    %v223 = vunpack.c.l.b16 %v116
    %v224 = vunpack.c.h.b16 %v116
    %v225 = vpack.c.b16 %v163, %v161
    %v226 = vpack.c.b16 %v164, %v162
    %v227 = vpack.c.b16 %v167, %v165
    %v228 = vpack.c.b16 %v168, %v166
    %v229 = vpack.c.b16 %v171, %v169
    %v230 = vpack.c.b16 %v172, %v170
    %v231 = vpack.c.b16 %v175, %v173
    %v232 = vpack.c.b16 %v176, %v174
    %v233 = vpack.c.b16 %v179, %v177
    %v234 = vpack.c.b16 %v180, %v178
    %v235 = vpack.c.b16 %v183, %v181
    %v236 = vpack.c.b16 %v184, %v182
    %v237 = vpack.c.b16 %v187, %v185
    %v238 = vpack.c.b16 %v188, %v186
    %v239 = vpack.c.b16 %v191, %v189
    %v240 = vpack.c.b16 %v192, %v190
    %v241 = vpack.c.b16 %v195, %v193
    %v242 = vpack.c.b16 %v196, %v194
    %v243 = vpack.c.b16 %v199, %v197
    %v244 = vpack.c.b16 %v200, %v198
    %v245 = vpack.c.b16 %v203, %v201
    %v246 = vpack.c.b16 %v204, %v202
    %v247 = vpack.c.b16 %v207, %v205
    %v248 = vpack.c.b16 %v208, %v206
    %v249 = vpack.c.b16 %v211, %v209
    %v250 = vpack.c.b16 %v212, %v210
    %v251 = vpack.c.b16 %v215, %v213
    %v252 = vpack.c.b16 %v216, %v214
    %v253 = vpack.c.b16 %v219, %v217
    %v254 = vpack.c.b16 %v220, %v218
    %v255 = vpack.c.b16 %v223, %v221
    %v256 = vpack.c.b16 %v224, %v222
    %289 = vmatprep.subr.bf16.mxu0 %v240
    %290 = vmatpush1.bf16.msra.mxu0 %v239
    %291 = vmatprep.subr.bf16.mxu0 %v238
    %292 = vmatpush1.bf16.msra.mxu0 %v237
    %293 = vmatprep.subr.bf16.mxu0 %v236
    %294 = vmatpush1.bf16.msra.mxu0 %v235
    %295 = vmatprep.subr.bf16.mxu0 %v234
    %296 = vmatpush1.bf16.msra.mxu0 %v233
    %297 = vmatprep.subr.bf16.mxu0 %v232
    %298 = vmatpush1.bf16.msra.mxu0 %v231
    %299 = vmatprep.subr.bf16.mxu0 %v230
    %300 = vmatpush1.bf16.msra.mxu0 %v229
    %301 = vmatprep.subr.bf16.mxu0 %v228
    %302 = vmatpush1.bf16.msra.mxu0 %v227
    %303 = vmatprep.subr.bf16.mxu0 %v226
    %304 = vmatpush1.bf16.msra.mxu0 %v225
    %305 = vmatprep.subr.bf16.mxu0 %v256
    %306 = vmatpush2.bf16.msra.mxu0 %v255
    %307 = vmatprep.subr.bf16.mxu0 %v254
    %308 = vmatpush2.bf16.msra.mxu0 %v253
    %309 = vmatprep.subr.bf16.mxu0 %v252
    %310 = vmatpush2.bf16.msra.mxu0 %v251
    %311 = vmatprep.subr.bf16.mxu0 %v250
    %312 = vmatpush2.bf16.msra.mxu0 %v249
    %313 = vmatprep.subr.bf16.mxu0 %v248
    %314 = vmatpush2.bf16.msra.mxu0 %v247
    %315 = vmatprep.subr.bf16.mxu0 %v246
    %316 = vmatpush2.bf16.msra.mxu0 %v245
    %317 = vmatprep.subr.bf16.mxu0 %v244
    %318 = vmatpush2.bf16.msra.mxu0 %v243
    %319 = vmatprep.subr.bf16.mxu0 %v242
    %320 = vmatpush2.bf16.msra.mxu0 %v241
    %321 = vmatprep.mubr.bf16.mxu0 %v84
    %322 = vmatmul.mubr.bf16.gmra.mxu0 %v83
    %v323 = vpop.f32.mrf.mxu0
    %v324 = vadd.f32 %v122, %v323
    %v325 = vpop.f32.mrf.mxu0
    %v326 = vadd.f32 %v126, %v325
    %v327 = vpop.f32.mrf.mxu0
    %v328 = vpop.f32.mrf.mxu0
    %329 = vdwg.mxu0
    %v330 = vmax.f32 %v324, 0.0
    %v331 = vmax.f32 %v326, 0.0
    %v332 = vpack.c.bf16 %v330, %v330
    %v333 = vpack.c.bf16 %v331, %v331
    %v334 = vld [vmem:[#allocation7] sm:$0xf]
    %v335 = vld [vmem:[#allocation7 + $0x4] sm:$0xf]
    %v336 = vld [vmem:[#allocation7 + $0x8] sm:$0xf]
    %v337 = vld [vmem:[#allocation7 + $0xc] sm:$0xf]
    %v338 = vld [vmem:[#allocation7 + $0x10] sm:$0xf]
    %v339 = vld [vmem:[#allocation7 + $0x14] sm:$0xf]
    %v340 = vld [vmem:[#allocation7 + $0x18] sm:$0xf]
    %v341 = vld [vmem:[#allocation7 + $0x1c] sm:$0xf]
    %v342 = vld [vmem:[#allocation7 + $0x20] sm:$0xf]
    %v343 = vld [vmem:[#allocation7 + $0x24] sm:$0xf]
    %v344 = vld [vmem:[#allocation7 + $0x28] sm:$0xf]
    %v345 = vld [vmem:[#allocation7 + $0x2c] sm:$0xf]
    %v346 = vld [vmem:[#allocation7 + $0x30] sm:$0xf]
    %v347 = vld [vmem:[#allocation7 + $0x34] sm:$0xf]
    %v348 = vld [vmem:[#allocation7 + $0x38] sm:$0xf]
    %v349 = vld [vmem:[#allocation7 + $0x3c] sm:$0xf]
    %v350 = vld [vmem:[#allocation7 + $0x40] sm:$0xf]
    %v351 = vld [vmem:[#allocation7 + $0x44] sm:$0xf]
    %v352 = vld [vmem:[#allocation7 + $0x48] sm:$0xf]
    %v353 = vld [vmem:[#allocation7 + $0x4c] sm:$0xf]
    %v354 = vld [vmem:[#allocation7 + $0x50] sm:$0xf]
    %v355 = vld [vmem:[#allocation7 + $0x54] sm:$0xf]
    %v356 = vld [vmem:[#allocation7 + $0x58] sm:$0xf]
    %v357 = vld [vmem:[#allocation7 + $0x5c] sm:$0xf]
    %v358 = vld [vmem:[#allocation7 + $0x60] sm:$0xf]
    %v359 = vld [vmem:[#allocation7 + $0x64] sm:$0xf]
    %v360 = vld [vmem:[#allocation7 + $0x68] sm:$0xf]
    %v361 = vld [vmem:[#allocation7 + $0x6c] sm:$0xf]
    %v362 = vld [vmem:[#allocation7 + $0x70] sm:$0xf]
    %v363 = vld [vmem:[#allocation7 + $0x74] sm:$0xf]
    %v364 = vld [vmem:[#allocation7 + $0x78] sm:$0xf]
    %v365 = vld [vmem:[#allocation7 + $0x7c] sm:$0xf]
    %v366 = vld [vmem:[%s4] sm:$0x1]
    %v368 = vlaneseq
    %v369 = vshrl.u32 %v368, 7
    %v370 = vsub.s32 0, %v369
    %v371 = vrot.slane %v366, %v370
    %v405 = vunpack.c.l.b16 %v334
    %v406 = vunpack.c.l.b16 %v335
    %v407 = vunpack.c.l.b16 %v336
    %v408 = vunpack.c.l.b16 %v337
    %v409 = vunpack.c.l.b16 %v338
    %v410 = vunpack.c.l.b16 %v339
    %v411 = vunpack.c.l.b16 %v340
    %v412 = vunpack.c.l.b16 %v341
    %v413 = vunpack.c.l.b16 %v342
    %v414 = vunpack.c.l.b16 %v343
    %v415 = vunpack.c.l.b16 %v344
    %v416 = vunpack.c.l.b16 %v345
    %v417 = vunpack.c.l.b16 %v346
    %v418 = vunpack.c.l.b16 %v347
    %v419 = vunpack.c.l.b16 %v348
    %v420 = vunpack.c.l.b16 %v349
    %v421 = vunpack.c.l.b16 %v350
    %v422 = vunpack.c.l.b16 %v351
    %v423 = vunpack.c.l.b16 %v352
    %v424 = vunpack.c.l.b16 %v353
    %v425 = vunpack.c.l.b16 %v354
    %v426 = vunpack.c.l.b16 %v355
    %v427 = vunpack.c.l.b16 %v356
    %v428 = vunpack.c.l.b16 %v357
    %v429 = vunpack.c.l.b16 %v358
    %v430 = vunpack.c.l.b16 %v359
    %v431 = vunpack.c.l.b16 %v360
    %v432 = vunpack.c.l.b16 %v361
    %v433 = vunpack.c.l.b16 %v362
    %v434 = vunpack.c.l.b16 %v363
    %v435 = vunpack.c.l.b16 %v364
    %v436 = vunpack.c.l.b16 %v365
    %v437 = vpack.c.b16 %v406, %v405
    %v438 = vpack.c.b16 %v408, %v407
    %v439 = vpack.c.b16 %v410, %v409
    %v440 = vpack.c.b16 %v412, %v411
    %v441 = vpack.c.b16 %v414, %v413
    %v442 = vpack.c.b16 %v416, %v415
    %v443 = vpack.c.b16 %v418, %v417
    %v444 = vpack.c.b16 %v420, %v419
    %v445 = vpack.c.b16 %v422, %v421
    %v446 = vpack.c.b16 %v424, %v423
    %v447 = vpack.c.b16 %v426, %v425
    %v448 = vpack.c.b16 %v428, %v427
    %v449 = vpack.c.b16 %v430, %v429
    %v450 = vpack.c.b16 %v432, %v431
    %v451 = vpack.c.b16 %v434, %v433
    %v452 = vpack.c.b16 %v436, %v435
    %469 = vmatprep.subr.bf16.mxu0 0
    %470 = vmatpush1.bf16.msra.mxu0 %v444
    %471 = vmatprep.subr.bf16.mxu0 0
    %472 = vmatpush1.bf16.msra.mxu0 %v443
    %473 = vmatprep.subr.bf16.mxu0 0
    %474 = vmatpush1.bf16.msra.mxu0 %v442
    %475 = vmatprep.subr.bf16.mxu0 0
    %476 = vmatpush1.bf16.msra.mxu0 %v441
    %477 = vmatprep.subr.bf16.mxu0 0
    %478 = vmatpush1.bf16.msra.mxu0 %v440
    %479 = vmatprep.subr.bf16.mxu0 0
    %480 = vmatpush1.bf16.msra.mxu0 %v439
    %481 = vmatprep.subr.bf16.mxu0 0
    %482 = vmatpush1.bf16.msra.mxu0 %v438
    %483 = vmatprep.subr.bf16.mxu0 0
    %484 = vmatpush1.bf16.msra.mxu0 %v437
    %485 = vmatprep.subr.bf16.mxu0 0
    %486 = vmatpush2.bf16.msra.mxu0 %v452
    %487 = vmatprep.subr.bf16.mxu0 0
    %488 = vmatpush2.bf16.msra.mxu0 %v451
    %489 = vmatprep.subr.bf16.mxu0 0
    %490 = vmatpush2.bf16.msra.mxu0 %v450
    %491 = vmatprep.subr.bf16.mxu0 0
    %492 = vmatpush2.bf16.msra.mxu0 %v449
    %493 = vmatprep.subr.bf16.mxu0 0
    %494 = vmatpush2.bf16.msra.mxu0 %v448
    %495 = vmatprep.subr.bf16.mxu0 0
    %496 = vmatpush2.bf16.msra.mxu0 %v447
    %497 = vmatprep.subr.bf16.mxu0 0
    %498 = vmatpush2.bf16.msra.mxu0 %v446
    %499 = vmatprep.subr.bf16.mxu0 0
    %500 = vmatpush2.bf16.msra.mxu0 %v445
    %501 = vmatprep.mubr.bf16.mxu0 %v333
    %502 = vmatmul.mubr.bf16.gmra.mxu0 %v332
    %v503 = vpop.f32.mrf.mxu0
    %v504 = vadd.f32 %v371, %v503
    %v505 = vpop.f32.mrf.mxu0
    %v506 = vpop.f32.mrf.mxu0
    %v507 = vpop.f32.mrf.mxu0
    %508 = vdwg.mxu0
    %v509 = vmax.f32 %v504, 0.0
    %v510 = vpack.c.bf16 %v509, %v509
    %v511 = vld [vmem:[#allocation8] sm:$0xf]
    %v512 = vld [vmem:[#allocation8 + $0x4] sm:$0xf]
    %v513 = vld [vmem:[#allocation8 + $0x8] sm:$0xf]
    %v514 = vld [vmem:[#allocation8 + $0xc] sm:$0xf]
    %v515 = vld [vmem:[#allocation8 + $0x10] sm:$0xf]
    %v516 = vld [vmem:[#allocation8 + $0x14] sm:$0xf]
    %v517 = vld [vmem:[#allocation8 + $0x18] sm:$0xf]
    %v518 = vld [vmem:[#allocation8 + $0x1c] sm:$0xf]
    %v519 = vld [vmem:[#allocation8 + $0x20] sm:$0xf]
    %v520 = vld [vmem:[#allocation8 + $0x24] sm:$0xf]
    %v521 = vld [vmem:[#allocation8 + $0x28] sm:$0xf]
    %v522 = vld [vmem:[#allocation8 + $0x2c] sm:$0xf]
    %v523 = vld [vmem:[#allocation8 + $0x30] sm:$0xf]
    %v524 = vld [vmem:[#allocation8 + $0x34] sm:$0xf]
    %v525 = vld [vmem:[#allocation8 + $0x38] sm:$0xf]
    %v526 = vld [vmem:[#allocation8 + $0x3c] sm:$0xf]
    %v527 = vld [vmem:[%s6] sm:$0x1]
    %v529 = vlaneseq
    %v530 = vshrl.u32 %v529, 7
    %v531 = vsub.s32 0, %v530
    %v532 = vrot.slane %v527, %v531
    %v550 = vunpack.c.l.b16 %v511
    %v551 = vunpack.c.l.b16 %v512
    %v552 = vunpack.c.l.b16 %v513
    %v553 = vunpack.c.l.b16 %v514
    %v554 = vunpack.c.l.b16 %v515
    %v555 = vunpack.c.l.b16 %v516
    %v556 = vunpack.c.l.b16 %v517
    %v557 = vunpack.c.l.b16 %v518
    %v558 = vunpack.c.l.b16 %v519
    %v559 = vunpack.c.l.b16 %v520
    %v560 = vunpack.c.l.b16 %v521
    %v561 = vunpack.c.l.b16 %v522
    %v562 = vunpack.c.l.b16 %v523
    %v563 = vunpack.c.l.b16 %v524
    %v564 = vunpack.c.l.b16 %v525
    %v565 = vunpack.c.l.b16 %v526
    %v566 = vpack.c.b16 %v551, %v550
    %v567 = vpack.c.b16 %v553, %v552
    %v568 = vpack.c.b16 %v555, %v554
    %v569 = vpack.c.b16 %v557, %v556
    %v570 = vpack.c.b16 %v559, %v558
    %v571 = vpack.c.b16 %v561, %v560
    %v572 = vpack.c.b16 %v563, %v562
    %v573 = vpack.c.b16 %v565, %v564
    %582 = vmatprep.subr.bf16.mxu0 0
    %583 = vmatpush1.bf16.msra.mxu0 %v573
    %584 = vmatprep.subr.bf16.mxu0 0
    %585 = vmatpush1.bf16.msra.mxu0 %v572
    %586 = vmatprep.subr.bf16.mxu0 0
    %587 = vmatpush1.bf16.msra.mxu0 %v571
    %588 = vmatprep.subr.bf16.mxu0 0
    %589 = vmatpush1.bf16.msra.mxu0 %v570
    %590 = vmatprep.subr.bf16.mxu0 0
    %591 = vmatpush1.bf16.msra.mxu0 %v569
    %592 = vmatprep.subr.bf16.mxu0 0
    %593 = vmatpush1.bf16.msra.mxu0 %v568
    %594 = vmatprep.subr.bf16.mxu0 0
    %595 = vmatpush1.bf16.msra.mxu0 %v567
    %596 = vmatprep.subr.bf16.mxu0 0
    %597 = vmatpush1.bf16.msra.mxu0 %v566
    %598 = vmatprep.subr.bf16.mxu0 0
    %599 = vmatpush2.bf16.msra.mxu0 0
    %600 = vmatprep.subr.bf16.mxu0 0
    %601 = vmatpush2.bf16.msra.mxu0 0
    %602 = vmatprep.subr.bf16.mxu0 0
    %603 = vmatpush2.bf16.msra.mxu0 0
    %604 = vmatprep.subr.bf16.mxu0 0
    %605 = vmatpush2.bf16.msra.mxu0 0
    %606 = vmatprep.subr.bf16.mxu0 0
    %607 = vmatpush2.bf16.msra.mxu0 0
    %608 = vmatprep.subr.bf16.mxu0 0
    %609 = vmatpush2.bf16.msra.mxu0 0
    %610 = vmatprep.subr.bf16.mxu0 0
    %611 = vmatpush2.bf16.msra.mxu0 0
    %612 = vmatprep.subr.bf16.mxu0 0
    %613 = vmatpush2.bf16.msra.mxu0 0
    %614 = vmatprep.mubr.bf16.mxu0 0
    %615 = vmatmul.mubr.bf16.gmra.mxu0 %v510
    %v616 = vpop.f32.mrf.mxu0
    %v617 = vadd.f32 %v532, %v616
    %v618 = vpop.f32.mrf.mxu0
    %v619 = vpop.f32.mrf.mxu0
    %v620 = vpop.f32.mrf.mxu0
    %621 = vdwg.mxu0
    %622 = vst [vmem:[#allocation10] sm:$0xff] %v617
    // Predicated region
    $region46: #{tpu_custom_call.1} parent=1 // pred_check
      _
    $region47: #{tpu_custom_call.1} parent=1 // pred_check_branch
      %624 = sbr.rel (0) target = $region49
    $region48: #{tpu_custom_call.1} parent=1 // pred_region
      %s626 = ssub.s32 128, 32
      %627 = vsyncadd [#allocation4], %s626
      %s628 = sshll.u32 [#allocation10], 4
      %s629 = int_to_ptr.vmem [resolvable:$true] %s628
      %634 = dma.vmem_to_hbm [thread:$0]  %s629, 32, %s7, [#allocation4], 32, 32, 2
    $region49: #{tpu_custom_call.1} parent=1 // pred_fallthru
      _
    // Predicated region
    $region50: #{tpu_custom_call.1} parent=1 // pred_check
      _
    $region51: #{tpu_custom_call.1} parent=1 // pred_check_branch
      %636 = sbr.rel (0) target = $region53
    $region52: #{tpu_custom_call.1} parent=1 // pred_region
      %637 = dma.done [#allocation4], 128
    $region53: #{tpu_custom_call.1} parent=1 // pred_fallthru
      _
    %638 = vsyncpa [#allocation3], 1
    %639 = vsyncpa [#allocation6], 1
    %640 = vsyncpa [#allocation9], 1
    %641 = vsyncpa [#allocation4], 1

</llo_original>
